<compile_context>
chip_gen: v5e
topology: v5e:2x2
jax: 0.10.0
libtpu: 0.0.40
codegen_flags: <defaults>
</compile_context>

<pallas_src>
import jax
import jax.numpy as jnp
from jax import lax
from jax.experimental import pallas as pl
from jax.experimental.pallas import tpu as pltpu


_VMEM_LIMIT = 32 * 1024 * 1024


def _round_up(x, m):
    return ((x + m - 1) // m) * m


def _pick_tile(dim, target):
    """Largest of (512, 256, 128) that divides `dim` and is <= target."""
    for t in (512, 256, 128):
        if t <= target and dim % t == 0:
            return t
    return dim


# ----------------------------------------------------------------------------
# Kernel A: fused self-expression  (coef = P - diag(diag P);  x_rec = coef @ x)
# ----------------------------------------------------------------------------
def _self_expression_kernel(p_ref, x_ref, coef_ref, xrec_ref):
    i = pl.program_id(0)   # row-block of coef / x_rec
    k = pl.program_id(1)   # col-block of coef == reduction block of the matmul

    tile = p_ref[...]
    # Square (tc, tc) tiles: the global diagonal only intersects tiles with
    # i == k.  The (row == col) & (i == k) mask is a handful of cheap VPU ops
    # per vreg and stays well under the MXU work, so it runs unconditionally —
    # this keeps the masked tile in registers for both the store and the dot
    # (no VMEM round trip through the output ref).
    row = lax.broadcasted_iota(jnp.int32, tile.shape, 0)
    col = lax.broadcasted_iota(jnp.int32, tile.shape, 1)
    coef = jnp.where((row == col) & (i == k), jnp.zeros_like(tile), tile)
    coef_ref[...] = coef

    # x_rec block (i, 0) stays VMEM-resident across the k axis (accumulator).
    @pl.when(k == 0)
    def _():
        xrec_ref[...] = jnp.zeros_like(xrec_ref)

    xrec_ref[...] += jnp.dot(coef, x_ref[...],
                             preferred_element_type=jnp.float32)


def self_expression(p_pad, x_pad):
    """Returns (coef, x_rec) where coef = p - diag(diag p), x_rec = coef @ x.

    Inputs must already be zero-padded to multiples of 128.
    """
    n, n2 = p_pad.shape
    n3, d = x_pad.shape
    assert n == n2 == n3 and n % 128 == 0 and d % 128 == 0
    tc = _pick_tile(n, 512)                 # square coef tiles, stream LHS big
    grid = (n // tc, n // tc)
    coef, xrec = pl.pallas_call(
        _self_expression_kernel,
        out_shape=(jax.ShapeDtypeStruct((n, n), jnp.float32),
                   jax.ShapeDtypeStruct((n, d), jnp.float32)),
        grid_spec=pltpu.PrefetchScalarGridSpec(
            num_scalar_prefetch=0,
            grid=grid,
            in_specs=[pl.BlockSpec((tc, tc), lambda i, k: (i, k)),   # P_v
                      pl.BlockSpec((tc, d), lambda i, k: (k, 0))],   # x_v (lane-dense)
            out_specs=[pl.BlockSpec((tc, tc), lambda i, k: (i, k)),  # coef_v
                       pl.BlockSpec((tc, d), lambda i, k: (i, 0))],  # x_v_rec
        ),
        compiler_params=pltpu.CompilerParams(
            dimension_semantics=("parallel", "arbitrary"),
            vmem_limit_bytes=_VMEM_LIMIT),
    )(p_pad, x_pad)
    return coef, xrec


# ----------------------------------------------------------------------------
# Kernel B: zero the diagonal (used only for coef_fusion).
# ----------------------------------------------------------------------------
def _zero_diag_kernel(p_ref, out_ref):
    i = pl.program_id(0)
    j = pl.program_id(1)

    @pl.when(i != j)
    def _():
        out_ref[...] = p_ref[...]

    @pl.when(i == j)
    def _():
        tile = p_ref[...]
        row = lax.broadcasted_iota(jnp.int32, tile.shape, 0)
        col = lax.broadcasted_iota(jnp.int32, tile.shape, 1)
        out_ref[...] = jnp.where(row == col, jnp.zeros_like(tile), tile)


def zero_diag(p_pad):
    n, n2 = p_pad.shape
    assert n == n2 and n % 128 == 0
    tc = _pick_tile(n, 512)
    return pl.pallas_call(
        _zero_diag_kernel,
        out_shape=jax.ShapeDtypeStruct((n, n), jnp.float32),
        grid_spec=pltpu.PrefetchScalarGridSpec(
            num_scalar_prefetch=0,
            grid=(n // tc, n // tc),
            in_specs=[pl.BlockSpec((tc, tc), lambda i, j: (i, j))],
            out_specs=pl.BlockSpec((tc, tc), lambda i, j: (i, j)),
        ),
        compiler_params=pltpu.CompilerParams(
            dimension_semantics=("parallel", "parallel"),
            vmem_limit_bytes=_VMEM_LIMIT),
    )(p_pad)


# ----------------------------------------------------------------------------
# Kernel C: batched matmul  out[v] = coef_fusion @ coef_v[v]   (single launch)
# ----------------------------------------------------------------------------
def _batched_matmul_kernel(a_ref, b_ref, o_ref):
    k = pl.program_id(3)

    # Output dtype is f32, so accumulate directly in the resident output block
    # (same block index for every k) — no scratch, no final copy.
    @pl.when(k == 0)
    def _():
        o_ref[...] = jnp.zeros_like(o_ref)

    o_ref[...] += jnp.dot(a_ref[...], b_ref[...],
                          preferred_element_type=jnp.float32)


def batched_matmul(a, b_stack):
    """out[v] = a @ b_stack[v] for all views in one pallas_call."""
    M, K = a.shape
    V, K2, N = b_stack.shape
    assert K == K2 and M % 128 == 0 and K % 128 == 0 and N % 128 == 0
    tm = _pick_tile(M, 256)
    tn = _pick_tile(N, 256)
    tk = _pick_tile(K, 512)
    grid = (V, M // tm, N // tn, K // tk)
    return pl.pallas_call(
        _batched_matmul_kernel,
        out_shape=jax.ShapeDtypeStruct((V, M, N), jnp.float32),
        grid_spec=pltpu.PrefetchScalarGridSpec(
            num_scalar_prefetch=0,
            grid=grid,
            in_specs=[pl.BlockSpec((tm, tk), lambda v, i, j, k: (i, k)),           # coef_fusion
                      pl.BlockSpec((None, tk, tn), lambda v, i, j, k: (v, k, j))], # coef_v stack
            out_specs=pl.BlockSpec((None, tm, tn), lambda v, i, j, k: (v, i, j)),
        ),
        compiler_params=pltpu.CompilerParams(
            dimension_semantics=("parallel", "parallel", "parallel", "arbitrary"),
            vmem_limit_bytes=_VMEM_LIMIT),
    )(a, b_stack)


# ----------------------------------------------------------------------------
# Module wrapper (plain-JAX glue; all hot-path compute is in the kernels).
# ----------------------------------------------------------------------------
def init_params(n_samples, n_views):
    # Matches nn.Parameter(0.0001 * torch.ones(n, n)) — deterministic.
    coef_fusion = 0.0001 * jnp.ones((n_samples, n_samples), jnp.float32)
    coef_views = [0.0001 * jnp.ones((n_samples, n_samples), jnp.float32)
                  for _ in range(n_views)]
    return coef_fusion, coef_views


def _pad2(a, rows, cols):
    pr, pc = rows - a.shape[0], cols - a.shape[1]
    if pr == 0 and pc == 0:
        return a
    return jnp.pad(a, ((0, pr), (0, pc)))


def multi_view_contrastive_clustering_forward(x_list, coef_fusion_param,
                                              coef_view_params):
    n = coef_fusion_param.shape[0]
    n_pad = _round_up(n, 128)
    n_views = len(x_list)

    # coef_fusion is both an output and the (reused) LHS of the batched matmul.
    coef_fusion_pad = zero_diag(_pad2(coef_fusion_param, n_pad, n_pad))

    x_v_rec, coef_v, coef_v_pad = [], [], []
    for x_v, p_v in zip(x_list, coef_view_params):
        d = x_v.shape[1]
        d_pad = _round_up(d, 128)      # lane-dense output / full MXU column block
        c_pad, xrec_pad = self_expression(_pad2(p_v, n_pad, n_pad),
                                          _pad2(x_v, n_pad, d_pad))
        coef_v_pad.append(c_pad)
        coef_v.append(c_pad[:n, :n])
        x_v_rec.append(xrec_pad[:n, :d])

    # Single batched pallas_call for all coef_fusion @ coef_v products
    # (the stack is O(V*N^2) wrapper glue; the O(V*N^3) matmul work is one
    # kernel launch).
    rec_stack = batched_matmul(coef_fusion_pad, jnp.stack(coef_v_pad, axis=0))
    coef_v_rec = [rec_stack[v, :n, :n] for v in range(n_views)]

    return x_v_rec, coef_v, coef_v_rec, coef_fusion_pad[:n, :n]


if __name__ == "__main__":
    n_samples = 256
    n_views = 2
    feature_dims = [64, 96]
    temperature = 0.5  # only used in .loss(), not in forward

    key = jax.random.PRNGKey(0)
    keys = jax.random.split(key, n_views)
    x_list = [jax.random.normal(keys[v], (n_samples, feature_dims[v]),
                                dtype=jnp.float32)
              for v in range(n_views)]

    coef_fusion_param, coef_view_params = init_params(n_samples, n_views)

    x_v_rec, coef_v, coef_v_rec, coef_fusion = \
        multi_view_contrastive_clustering_forward(
            x_list, coef_fusion_param, coef_view_params)

    # Block on everything.
    for t in x_v_rec + coef_v + coef_v_rec + [coef_fusion]:
        jax.block_until_ready(t)

    # Sanity check vs pure-JAX reference.
    cf_ref = coef_fusion_param - jnp.diag(jnp.diag(coef_fusion_param))
    assert jnp.allclose(coef_fusion, cf_ref, atol=1e-6)
    for v in range(n_views):
        cv_ref = coef_view_params[v] - jnp.diag(jnp.diag(coef_view_params[v]))
        assert jnp.allclose(coef_v[v], cv_ref, atol=1e-6)
        assert jnp.allclose(x_v_rec[v], cv_ref @ x_list[v],
                            rtol=1e-3, atol=1e-4)
        assert jnp.allclose(coef_v_rec[v], cf_ref @ cv_ref,
                            rtol=1e-3, atol=1e-7)

    print("KERNEL_OK")
</pallas_src>

<mosaic_0001>
module attributes {stable_mosaic.version = 11 : i64} {
  func.func @_zero_diag_kernel(%arg0: i32, %arg1: i32, %arg2: memref<256x256xf32, #tpu.memory_space<vmem>>, %arg3: memref<256x256xf32, #tpu.memory_space<vmem>>) attributes {dimension_semantics = [#tpu.dimension_semantics<parallel>, #tpu.dimension_semantics<parallel>], iteration_bounds = array<i64: 1, 1>, scalar_prefetch = 0 : i64, scratch_operands = 0 : i64, tpu.core_type = #tpu.core_type<tc>, window_params = [{transform_indices = @transform_0, window_bounds = array<i64: 256, 256>}, {transform_indices = @transform_1, window_bounds = array<i64: 256, 256>}]} {
    %0 = arith.cmpi ne, %arg0, %arg1 : i32
    %1 = arith.extui %0 : i1 to i32
    %c0_i32 = arith.constant 0 : i32
    %2 = arith.cmpi ne, %1, %c0_i32 : i32
    scf.if %2 {
      %c0 = arith.constant 0 : index
      %c0_1 = arith.constant 0 : index
      %6 = vector.load %arg2[%c0, %c0_1] : memref<256x256xf32, #tpu.memory_space<vmem>>, vector<256x256xf32>
      %c0_2 = arith.constant 0 : index
      %c0_3 = arith.constant 0 : index
      %7 = vector.load %arg3[%c0_2, %c0_3] : memref<256x256xf32, #tpu.memory_space<vmem>>, vector<256x256xf32>
      tpu.vector_store %arg3[%c0_2, %c0_3], %6 {strides = array<i32>} : memref<256x256xf32, #tpu.memory_space<vmem>>, vector<256x256xf32>,
    } else {
    }
    %3 = arith.cmpi eq, %arg0, %arg1 : i32
    %4 = arith.extui %3 : i1 to i32
    %c0_i32_0 = arith.constant 0 : i32
    %5 = arith.cmpi ne, %4, %c0_i32_0 : i32
    scf.if %5 {
      %c0 = arith.constant 0 : index
      %c0_1 = arith.constant 0 : index
      %6 = vector.load %arg2[%c0, %c0_1] : memref<256x256xf32, #tpu.memory_space<vmem>>, vector<256x256xf32>
      %7 = tpu.iota {dimensions = array<i32: 0>} : vector<256x256xi32>
      %8 = tpu.iota {dimensions = array<i32: 1>} : vector<256x256xi32>
      %9 = arith.cmpi eq, %7, %8 : vector<256x256xi32>
      %cst = arith.constant 0.000000e+00 : f32
      %10 = vector.broadcast %cst : f32 to vector<256x256xf32>
      %11 = arith.select %9, %10, %6 : vector<256x256xi1>, vector<256x256xf32>
      %c0_2 = arith.constant 0 : index
      %c0_3 = arith.constant 0 : index
      %12 = vector.load %arg3[%c0_2, %c0_3] : memref<256x256xf32, #tpu.memory_space<vmem>>, vector<256x256xf32>
      tpu.vector_store %arg3[%c0_2, %c0_3], %11 {strides = array<i32>} : memref<256x256xf32, #tpu.memory_space<vmem>>, vector<256x256xf32>,
    } else {
    }
    return
  }
  func.func @transform_0(%arg0: i32, %arg1: i32) -> (i32, i32) {
    %c0_i32 = arith.constant 0 : i32
    return %arg0, %arg1 : i32, i32
  }
  func.func @transform_1(%arg0: i32, %arg1: i32) -> (i32, i32) {
    %c0_i32 = arith.constant 0 : i32
    return %arg0, %arg1 : i32, i32
  }
}

</mosaic_0001>

<llo_original>
// kernel: tpu_custom_call.1
$region0: #{tpu_custom_call.1}
  #allocation0 [shape = 'u32[]', space=smem, size = 0x4, offset = 0x4, fixed_abs, tag = 'smem constant byte address 0x4 - core index']
  #allocation1 [shape = 'u32[72,128]{1,0:T(1,128)}', space=vmem, size = 0x9000, scoped, tag = 'internal scratch']
  %s0 = inlined_call_operand.hbm [shape: f32[256,256], index: 0, kind: input, shape index: {}]
  %s1 = inlined_call_operand.hbm [shape: f32[256,256], index: 1, kind: output, shape index: {}]
  %s2 = sld [smem:[#allocation0]]
  $region26: #{tpu_custom_call.1} parent=0
    _
  %s4 = ssub.s32 1, %s2
  %s5 = scalar_select 0, %s4, %s2
  $region1: #{tpu_custom_call.1} parent=0
    #allocation2 [shape = 'u8[262144]{0}', space=vmem, size = 0x40000, scoped, tag = 'input window, operand 0, single buffered']
    #allocation3 [shape = 's32[1]{0}', space=sflag, size = 0x4, scoped, tag = 'scoped memory for tpu_custom_call.1']
    #allocation4 [shape = 's32[1]{0}', space=sflag, size = 0x4, scoped, tag = 'scoped memory for tpu_custom_call.1']
    #allocation5 [shape = 'u8[262144]{0}', space=vmem, size = 0x40000, scoped, tag = 'output window, operand 0, single buffered']
    %6 = vsyncpa [#allocation3], 0
    %7 = vsyncpa [#allocation4], 0
    // Predicated region
    $region2: #{tpu_custom_call.1} parent=1 // pred_check
      _
    $region3: #{tpu_custom_call.1} parent=1 // pred_check_branch
      %9 = sbr.rel (0) target = $region5
    $region4: #{tpu_custom_call.1} parent=1 // pred_region
      %11 = vsyncadd [#allocation3], 0
      %s12 = sshll.u32 %s0, 4
      %s13 = int_to_ptr.hbm [resolvable:$true] %s12
      %s14 = sshll.u32 [#allocation2], 4
      %s15 = int_to_ptr.vmem [resolvable:$true] %s14
      %20 = dma.hbm_to_vmem [thread:$0]  %s13, 8192, %s15, [#allocation3], 256, 256, 16
    $region5: #{tpu_custom_call.1} parent=1 // pred_fallthru
      _
    // Predicated region
    $region6: #{tpu_custom_call.1} parent=1 // pred_check
      _
    $region7: #{tpu_custom_call.1} parent=1 // pred_check_branch
      %22 = sbr.rel (0) target = $region9
    $region8: #{tpu_custom_call.1} parent=1 // pred_region
      %24 = dma.done [#allocation3], 8192
    $region9: #{tpu_custom_call.1} parent=1 // pred_fallthru
      _
    %p25 = scmp.ne.s32.totalorder 0, 0
    // Predicated region
    $region10: #{tpu_custom_call.1} parent=1 // pred_check
      %p26 = pneg %p25
    $region11: #{tpu_custom_call.1} parent=1 // pred_check_branch
      %28 = sbr.rel (%p26) target = $region13
    $region12: #{tpu_custom_call.1} parent=1 // pred_region
      %v29 = vld [vmem:[#allocation2] sm:$0xff]
      %v30 = vld [vmem:[#allocation2 + $0x8] sm:$0xff]
      %v31 = vld [vmem:[#allocation2 + $0x10] sm:$0xff]
      %v32 = vld [vmem:[#allocation2 + $0x18] sm:$0xff]
      %v33 = vld [vmem:[#allocation2 + $0x20] sm:$0xff]
      %v34 = vld [vmem:[#allocation2 + $0x28] sm:$0xff]
      %v35 = vld [vmem:[#allocation2 + $0x30] sm:$0xff]
      %v36 = vld [vmem:[#allocation2 + $0x38] sm:$0xff]
      %v37 = vld [vmem:[#allocation2 + $0x40] sm:$0xff]
      %v38 = vld [vmem:[#allocation2 + $0x48] sm:$0xff]
      %v39 = vld [vmem:[#allocation2 + $0x50] sm:$0xff]
      %v40 = vld [vmem:[#allocation2 + $0x58] sm:$0xff]
      %v41 = vld [vmem:[#allocation2 + $0x60] sm:$0xff]
      %v42 = vld [vmem:[#allocation2 + $0x68] sm:$0xff]
      %v43 = vld [vmem:[#allocation2 + $0x70] sm:$0xff]
      %v44 = vld [vmem:[#allocation2 + $0x78] sm:$0xff]
      %v45 = vld [vmem:[#allocation2 + $0x80] sm:$0xff]
      %v46 = vld [vmem:[#allocation2 + $0x88] sm:$0xff]
      %v47 = vld [vmem:[#allocation2 + $0x90] sm:$0xff]
      %v48 = vld [vmem:[#allocation2 + $0x98] sm:$0xff]
      %v49 = vld [vmem:[#allocation2 + $0xa0] sm:$0xff]
      %v50 = vld [vmem:[#allocation2 + $0xa8] sm:$0xff]
      %v51 = vld [vmem:[#allocation2 + $0xb0] sm:$0xff]
      %v52 = vld [vmem:[#allocation2 + $0xb8] sm:$0xff]
      %v53 = vld [vmem:[#allocation2 + $0xc0] sm:$0xff]
      %v54 = vld [vmem:[#allocation2 + $0xc8] sm:$0xff]
      %v55 = vld [vmem:[#allocation2 + $0xd0] sm:$0xff]
      %v56 = vld [vmem:[#allocation2 + $0xd8] sm:$0xff]
      %v57 = vld [vmem:[#allocation2 + $0xe0] sm:$0xff]
      %v58 = vld [vmem:[#allocation2 + $0xe8] sm:$0xff]
      %v59 = vld [vmem:[#allocation2 + $0xf0] sm:$0xff]
      %v60 = vld [vmem:[#allocation2 + $0xf8] sm:$0xff]
      %v61 = vld [vmem:[#allocation2 + $0x100] sm:$0xff]
      %v62 = vld [vmem:[#allocation2 + $0x108] sm:$0xff]
      %v63 = vld [vmem:[#allocation2 + $0x110] sm:$0xff]
      %v64 = vld [vmem:[#allocation2 + $0x118] sm:$0xff]
      %v65 = vld [vmem:[#allocation2 + $0x120] sm:$0xff]
      %v66 = vld [vmem:[#allocation2 + $0x128] sm:$0xff]
      %v67 = vld [vmem:[#allocation2 + $0x130] sm:$0xff]
      %v68 = vld [vmem:[#allocation2 + $0x138] sm:$0xff]
      %v69 = vld [vmem:[#allocation2 + $0x140] sm:$0xff]
      %v70 = vld [vmem:[#allocation2 + $0x148] sm:$0xff]
      %v71 = vld [vmem:[#allocation2 + $0x150] sm:$0xff]
      %v72 = vld [vmem:[#allocation2 + $0x158] sm:$0xff]
      %v73 = vld [vmem:[#allocation2 + $0x160] sm:$0xff]
      %v74 = vld [vmem:[#allocation2 + $0x168] sm:$0xff]
      %v75 = vld [vmem:[#allocation2 + $0x170] sm:$0xff]
      %v76 = vld [vmem:[#allocation2 + $0x178] sm:$0xff]
      %v77 = vld [vmem:[#allocation2 + $0x180] sm:$0xff]
      %v78 = vld [vmem:[#allocation2 + $0x188] sm:$0xff]
      %v79 = vld [vmem:[#allocation2 + $0x190] sm:$0xff]
      %v80 = vld [vmem:[#allocation2 + $0x198] sm:$0xff]
      %v81 = vld [vmem:[#allocation2 + $0x1a0] sm:$0xff]
      %v82 = vld [vmem:[#allocation2 + $0x1a8] sm:$0xff]
      %v83 = vld [vmem:[#allocation2 + $0x1b0] sm:$0xff]
      %v84 = vld [vmem:[#allocation2 + $0x1b8] sm:$0xff]
      %v85 = vld [vmem:[#allocation2 + $0x1c0] sm:$0xff]
      %v86 = vld [vmem:[#allocation2 + $0x1c8] sm:$0xff]
      %v87 = vld [vmem:[#allocation2 + $0x1d0] sm:$0xff]
      %v88 = vld [vmem:[#allocation2 + $0x1d8] sm:$0xff]
      %v89 = vld [vmem:[#allocation2 + $0x1e0] sm:$0xff]
      %v90 = vld [vmem:[#allocation2 + $0x1e8] sm:$0xff]
      %v91 = vld [vmem:[#allocation2 + $0x1f0] sm:$0xff]
      %v92 = vld [vmem:[#allocation2 + $0x1f8] sm:$0xff]
      %93 = vst [vmem:[#allocation5] sm:$0xff] %v29
      %94 = vst [vmem:[#allocation5 + $0x8] sm:$0xff] %v30
      %95 = vst [vmem:[#allocation5 + $0x10] sm:$0xff] %v31
      %96 = vst [vmem:[#allocation5 + $0x18] sm:$0xff] %v32
      %97 = vst [vmem:[#allocation5 + $0x20] sm:$0xff] %v33
      %98 = vst [vmem:[#allocation5 + $0x28] sm:$0xff] %v34
      %99 = vst [vmem:[#allocation5 + $0x30] sm:$0xff] %v35
      %100 = vst [vmem:[#allocation5 + $0x38] sm:$0xff] %v36
      %101 = vst [vmem:[#allocation5 + $0x40] sm:$0xff] %v37
      %102 = vst [vmem:[#allocation5 + $0x48] sm:$0xff] %v38
      %103 = vst [vmem:[#allocation5 + $0x50] sm:$0xff] %v39
      %104 = vst [vmem:[#allocation5 + $0x58] sm:$0xff] %v40
      %105 = vst [vmem:[#allocation5 + $0x60] sm:$0xff] %v41
      %106 = vst [vmem:[#allocation5 + $0x68] sm:$0xff] %v42
      %107 = vst [vmem:[#allocation5 + $0x70] sm:$0xff] %v43
      %108 = vst [vmem:[#allocation5 + $0x78] sm:$0xff] %v44
      %109 = vst [vmem:[#allocation5 + $0x80] sm:$0xff] %v45
      %110 = vst [vmem:[#allocation5 + $0x88] sm:$0xff] %v46
      %111 = vst [vmem:[#allocation5 + $0x90] sm:$0xff] %v47
      %112 = vst [vmem:[#allocation5 + $0x98] sm:$0xff] %v48
      %113 = vst [vmem:[#allocation5 + $0xa0] sm:$0xff] %v49
      %114 = vst [vmem:[#allocation5 + $0xa8] sm:$0xff] %v50
      %115 = vst [vmem:[#allocation5 + $0xb0] sm:$0xff] %v51
      %116 = vst [vmem:[#allocation5 + $0xb8] sm:$0xff] %v52
      %117 = vst [vmem:[#allocation5 + $0xc0] sm:$0xff] %v53
      %118 = vst [vmem:[#allocation5 + $0xc8] sm:$0xff] %v54
      %119 = vst [vmem:[#allocation5 + $0xd0] sm:$0xff] %v55
      %120 = vst [vmem:[#allocation5 + $0xd8] sm:$0xff] %v56
      %121 = vst [vmem:[#allocation5 + $0xe0] sm:$0xff] %v57
      %122 = vst [vmem:[#allocation5 + $0xe8] sm:$0xff] %v58
      %123 = vst [vmem:[#allocation5 + $0xf0] sm:$0xff] %v59
      %124 = vst [vmem:[#allocation5 + $0xf8] sm:$0xff] %v60
      %125 = vst [vmem:[#allocation5 + $0x100] sm:$0xff] %v61
      %126 = vst [vmem:[#allocation5 + $0x108] sm:$0xff] %v62
      %127 = vst [vmem:[#allocation5 + $0x110] sm:$0xff] %v63
      %128 = vst [vmem:[#allocation5 + $0x118] sm:$0xff] %v64
      %129 = vst [vmem:[#allocation5 + $0x120] sm:$0xff] %v65
      %130 = vst [vmem:[#allocation5 + $0x128] sm:$0xff] %v66
      %131 = vst [vmem:[#allocation5 + $0x130] sm:$0xff] %v67
      %132 = vst [vmem:[#allocation5 + $0x138] sm:$0xff] %v68
      %133 = vst [vmem:[#allocation5 + $0x140] sm:$0xff] %v69
      %134 = vst [vmem:[#allocation5 + $0x148] sm:$0xff] %v70
      %135 = vst [vmem:[#allocation5 + $0x150] sm:$0xff] %v71
      %136 = vst [vmem:[#allocation5 + $0x158] sm:$0xff] %v72
      %137 = vst [vmem:[#allocation5 + $0x160] sm:$0xff] %v73
      %138 = vst [vmem:[#allocation5 + $0x168] sm:$0xff] %v74
      %139 = vst [vmem:[#allocation5 + $0x170] sm:$0xff] %v75
      %140 = vst [vmem:[#allocation5 + $0x178] sm:$0xff] %v76
      %141 = vst [vmem:[#allocation5 + $0x180] sm:$0xff] %v77
      %142 = vst [vmem:[#allocation5 + $0x188] sm:$0xff] %v78
      %143 = vst [vmem:[#allocation5 + $0x190] sm:$0xff] %v79
      %144 = vst [vmem:[#allocation5 + $0x198] sm:$0xff] %v80
      %145 = vst [vmem:[#allocation5 + $0x1a0] sm:$0xff] %v81
      %146 = vst [vmem:[#allocation5 + $0x1a8] sm:$0xff] %v82
      %147 = vst [vmem:[#allocation5 + $0x1b0] sm:$0xff] %v83
      %148 = vst [vmem:[#allocation5 + $0x1b8] sm:$0xff] %v84
      %149 = vst [vmem:[#allocation5 + $0x1c0] sm:$0xff] %v85
      %150 = vst [vmem:[#allocation5 + $0x1c8] sm:$0xff] %v86
      %151 = vst [vmem:[#allocation5 + $0x1d0] sm:$0xff] %v87
      %152 = vst [vmem:[#allocation5 + $0x1d8] sm:$0xff] %v88
      %153 = vst [vmem:[#allocation5 + $0x1e0] sm:$0xff] %v89
      %154 = vst [vmem:[#allocation5 + $0x1e8] sm:$0xff] %v90
      %155 = vst [vmem:[#allocation5 + $0x1f0] sm:$0xff] %v91
      %156 = vst [vmem:[#allocation5 + $0x1f8] sm:$0xff] %v92
    $region13: #{tpu_custom_call.1} parent=1 // pred_fallthru
      _
    %p157 = scmp.eq.s32.totalorder 0, 0
    // Predicated region
    $region14: #{tpu_custom_call.1} parent=1 // pred_check
      %p158 = pneg %p157
    $region15: #{tpu_custom_call.1} parent=1 // pred_check_branch
      %160 = sbr.rel (%p158) target = $region17
    $region16: #{tpu_custom_call.1} parent=1 // pred_region
      %v161 = vld [vmem:[#allocation2] sm:$0xff]
      %v162 = vld [vmem:[#allocation2 + $0x8] sm:$0xff]
      %v163 = vld [vmem:[#allocation2 + $0x10] sm:$0xff]
      %v164 = vld [vmem:[#allocation2 + $0x18] sm:$0xff]
      %v165 = vld [vmem:[#allocation2 + $0x20] sm:$0xff]
      %v166 = vld [vmem:[#allocation2 + $0x28] sm:$0xff]
      %v167 = vld [vmem:[#allocation2 + $0x30] sm:$0xff]
      %v168 = vld [vmem:[#allocation2 + $0x38] sm:$0xff]
      %v169 = vld [vmem:[#allocation2 + $0x40] sm:$0xff]
      %v170 = vld [vmem:[#allocation2 + $0x48] sm:$0xff]
      %v171 = vld [vmem:[#allocation2 + $0x50] sm:$0xff]
      %v172 = vld [vmem:[#allocation2 + $0x58] sm:$0xff]
      %v173 = vld [vmem:[#allocation2 + $0x60] sm:$0xff]
      %v174 = vld [vmem:[#allocation2 + $0x68] sm:$0xff]
      %v175 = vld [vmem:[#allocation2 + $0x70] sm:$0xff]
      %v176 = vld [vmem:[#allocation2 + $0x78] sm:$0xff]
      %v177 = vld [vmem:[#allocation2 + $0x80] sm:$0xff]
      %v178 = vld [vmem:[#allocation2 + $0x88] sm:$0xff]
      %v179 = vld [vmem:[#allocation2 + $0x90] sm:$0xff]
      %v180 = vld [vmem:[#allocation2 + $0x98] sm:$0xff]
      %v181 = vld [vmem:[#allocation2 + $0xa0] sm:$0xff]
      %v182 = vld [vmem:[#allocation2 + $0xa8] sm:$0xff]
      %v183 = vld [vmem:[#allocation2 + $0xb0] sm:$0xff]
      %v184 = vld [vmem:[#allocation2 + $0xb8] sm:$0xff]
      %v185 = vld [vmem:[#allocation2 + $0xc0] sm:$0xff]
      %v186 = vld [vmem:[#allocation2 + $0xc8] sm:$0xff]
      %v187 = vld [vmem:[#allocation2 + $0xd0] sm:$0xff]
      %v188 = vld [vmem:[#allocation2 + $0xd8] sm:$0xff]
      %v189 = vld [vmem:[#allocation2 + $0xe0] sm:$0xff]
      %v190 = vld [vmem:[#allocation2 + $0xe8] sm:$0xff]
      %v191 = vld [vmem:[#allocation2 + $0xf0] sm:$0xff]
      %v192 = vld [vmem:[#allocation2 + $0xf8] sm:$0xff]
      %v193 = vld [vmem:[#allocation2 + $0x100] sm:$0xff]
      %v194 = vld [vmem:[#allocation2 + $0x108] sm:$0xff]
      %v195 = vld [vmem:[#allocation2 + $0x110] sm:$0xff]
      %v196 = vld [vmem:[#allocation2 + $0x118] sm:$0xff]
      %v197 = vld [vmem:[#allocation2 + $0x120] sm:$0xff]
      %v198 = vld [vmem:[#allocation2 + $0x128] sm:$0xff]
      %v199 = vld [vmem:[#allocation2 + $0x130] sm:$0xff]
      %v200 = vld [vmem:[#allocation2 + $0x138] sm:$0xff]
      %v201 = vld [vmem:[#allocation2 + $0x140] sm:$0xff]
      %v202 = vld [vmem:[#allocation2 + $0x148] sm:$0xff]
      %v203 = vld [vmem:[#allocation2 + $0x150] sm:$0xff]
      %v204 = vld [vmem:[#allocation2 + $0x158] sm:$0xff]
      %v205 = vld [vmem:[#allocation2 + $0x160] sm:$0xff]
      %v206 = vld [vmem:[#allocation2 + $0x168] sm:$0xff]
      %v207 = vld [vmem:[#allocation2 + $0x170] sm:$0xff]
      %v208 = vld [vmem:[#allocation2 + $0x178] sm:$0xff]
      %v209 = vld [vmem:[#allocation2 + $0x180] sm:$0xff]
      %v210 = vld [vmem:[#allocation2 + $0x188] sm:$0xff]
      %v211 = vld [vmem:[#allocation2 + $0x190] sm:$0xff]
      %v212 = vld [vmem:[#allocation2 + $0x198] sm:$0xff]
      %v213 = vld [vmem:[#allocation2 + $0x1a0] sm:$0xff]
      %v214 = vld [vmem:[#allocation2 + $0x1a8] sm:$0xff]
      %v215 = vld [vmem:[#allocation2 + $0x1b0] sm:$0xff]
      %v216 = vld [vmem:[#allocation2 + $0x1b8] sm:$0xff]
      %v217 = vld [vmem:[#allocation2 + $0x1c0] sm:$0xff]
      %v218 = vld [vmem:[#allocation2 + $0x1c8] sm:$0xff]
      %v219 = vld [vmem:[#allocation2 + $0x1d0] sm:$0xff]
      %v220 = vld [vmem:[#allocation2 + $0x1d8] sm:$0xff]
      %v221 = vld [vmem:[#allocation2 + $0x1e0] sm:$0xff]
      %v222 = vld [vmem:[#allocation2 + $0x1e8] sm:$0xff]
      %v223 = vld [vmem:[#allocation2 + $0x1f0] sm:$0xff]
      %v224 = vld [vmem:[#allocation2 + $0x1f8] sm:$0xff]
      %v225 = vlaneseq
      %v226 = vshrl.u32 %v225, 7
      %v227 = vadd.s32 %v226, 8
      %v228 = vadd.s32 %v226, 16
      %v229 = vadd.s32 %v226, 24
      %v230 = vadd.s32 %v226, 32
      %v231 = vadd.s32 %v226, 40
      %v232 = vadd.s32 %v226, 48
      %v233 = vadd.s32 %v226, 56
      %v234 = vadd.s32 %v226, 64
      %v235 = vadd.s32 %v226, 72
      %v236 = vadd.s32 %v226, 80
      %v237 = vadd.s32 %v226, 88
      %v238 = vadd.s32 %v226, 96
      %v239 = vadd.s32 %v226, 104
      %v240 = vadd.s32 %v226, 112
      %v241 = vadd.s32 %v226, 120
      %v242 = vadd.s32 %v226, 128
      %v243 = vadd.s32 %v226, 136
      %v244 = vadd.s32 %v226, 144
      %v245 = vadd.s32 %v226, 152
      %v246 = vadd.s32 %v226, 160
      %v247 = vadd.s32 %v226, 168
      %v248 = vadd.s32 %v226, 176
      %v249 = vadd.s32 %v226, 184
      %v250 = vadd.s32 %v226, 192
      %v251 = vadd.s32 %v226, 200
      %v252 = vadd.s32 %v226, 208
      %v253 = vadd.s32 %v226, 216
      %v254 = vadd.s32 %v226, 224
      %v255 = vadd.s32 %v226, 232
      %v256 = vadd.s32 %v226, 240
      %v257 = vadd.s32 %v226, 248
      %v258 = vlaneseq
      %v259 = vand.u32 %v258, 127
      %v260 = vadd.s32 %v259, 128
      %vm261 = vcmp.eq.s32.totalorder %v226, %v259
      %vm262 = vcmp.eq.s32.totalorder %v226, %v260
      %vm263 = vcmp.eq.s32.totalorder %v227, %v259
      %vm264 = vcmp.eq.s32.totalorder %v227, %v260
      %vm265 = vcmp.eq.s32.totalorder %v228, %v259
      %vm266 = vcmp.eq.s32.totalorder %v228, %v260
      %vm267 = vcmp.eq.s32.totalorder %v229, %v259
      %vm268 = vcmp.eq.s32.totalorder %v229, %v260
      %vm269 = vcmp.eq.s32.totalorder %v230, %v259
      %vm270 = vcmp.eq.s32.totalorder %v230, %v260
      %vm271 = vcmp.eq.s32.totalorder %v231, %v259
      %vm272 = vcmp.eq.s32.totalorder %v231, %v260
      %vm273 = vcmp.eq.s32.totalorder %v232, %v259
      %vm274 = vcmp.eq.s32.totalorder %v232, %v260
      %vm275 = vcmp.eq.s32.totalorder %v233, %v259
      %vm276 = vcmp.eq.s32.totalorder %v233, %v260
      %vm277 = vcmp.eq.s32.totalorder %v234, %v259
      %vm278 = vcmp.eq.s32.totalorder %v234, %v260
      %vm279 = vcmp.eq.s32.totalorder %v235, %v259
      %vm280 = vcmp.eq.s32.totalorder %v235, %v260
      %vm281 = vcmp.eq.s32.totalorder %v236, %v259
      %vm282 = vcmp.eq.s32.totalorder %v236, %v260
      %vm283 = vcmp.eq.s32.totalorder %v237, %v259
      %vm284 = vcmp.eq.s32.totalorder %v237, %v260
      %vm285 = vcmp.eq.s32.totalorder %v238, %v259
      %vm286 = vcmp.eq.s32.totalorder %v238, %v260
      %vm287 = vcmp.eq.s32.totalorder %v239, %v259
      %vm288 = vcmp.eq.s32.totalorder %v239, %v260
      %vm289 = vcmp.eq.s32.totalorder %v240, %v259
      %vm290 = vcmp.eq.s32.totalorder %v240, %v260
      %vm291 = vcmp.eq.s32.totalorder %v241, %v259
      %vm292 = vcmp.eq.s32.totalorder %v241, %v260
      %vm293 = vcmp.eq.s32.totalorder %v242, %v259
      %vm294 = vcmp.eq.s32.totalorder %v242, %v260
      %vm295 = vcmp.eq.s32.totalorder %v243, %v259
      %vm296 = vcmp.eq.s32.totalorder %v243, %v260
      %vm297 = vcmp.eq.s32.totalorder %v244, %v259
      %vm298 = vcmp.eq.s32.totalorder %v244, %v260
      %vm299 = vcmp.eq.s32.totalorder %v245, %v259
      %vm300 = vcmp.eq.s32.totalorder %v245, %v260
      %vm301 = vcmp.eq.s32.totalorder %v246, %v259
      %vm302 = vcmp.eq.s32.totalorder %v246, %v260
      %vm303 = vcmp.eq.s32.totalorder %v247, %v259
      %vm304 = vcmp.eq.s32.totalorder %v247, %v260
      %vm305 = vcmp.eq.s32.totalorder %v248, %v259
      %vm306 = vcmp.eq.s32.totalorder %v248, %v260
      %vm307 = vcmp.eq.s32.totalorder %v249, %v259
      %vm308 = vcmp.eq.s32.totalorder %v249, %v260
      %vm309 = vcmp.eq.s32.totalorder %v250, %v259
      %vm310 = vcmp.eq.s32.totalorder %v250, %v260
      %vm311 = vcmp.eq.s32.totalorder %v251, %v259
      %vm312 = vcmp.eq.s32.totalorder %v251, %v260
      %vm313 = vcmp.eq.s32.totalorder %v252, %v259
      %vm314 = vcmp.eq.s32.totalorder %v252, %v260
      %vm315 = vcmp.eq.s32.totalorder %v253, %v259
      %vm316 = vcmp.eq.s32.totalorder %v253, %v260
      %vm317 = vcmp.eq.s32.totalorder %v254, %v259
      %vm318 = vcmp.eq.s32.totalorder %v254, %v260
      %vm319 = vcmp.eq.s32.totalorder %v255, %v259
      %vm320 = vcmp.eq.s32.totalorder %v255, %v260
      %vm321 = vcmp.eq.s32.totalorder %v256, %v259
      %vm322 = vcmp.eq.s32.totalorder %v256, %v260
      %vm323 = vcmp.eq.s32.totalorder %v257, %v259
      %vm324 = vcmp.eq.s32.totalorder %v257, %v260
      %v325 = vsel %vm261, 0.0, %v161
      %v326 = vsel %vm262, 0.0, %v162
      %v327 = vsel %vm263, 0.0, %v163
      %v328 = vsel %vm264, 0.0, %v164
      %v329 = vsel %vm265, 0.0, %v165
      %v330 = vsel %vm266, 0.0, %v166
      %v331 = vsel %vm267, 0.0, %v167
      %v332 = vsel %vm268, 0.0, %v168
      %v333 = vsel %vm269, 0.0, %v169
      %v334 = vsel %vm270, 0.0, %v170
      %v335 = vsel %vm271, 0.0, %v171
      %v336 = vsel %vm272, 0.0, %v172
      %v337 = vsel %vm273, 0.0, %v173
      %v338 = vsel %vm274, 0.0, %v174
      %v339 = vsel %vm275, 0.0, %v175
      %v340 = vsel %vm276, 0.0, %v176
      %v341 = vsel %vm277, 0.0, %v177
      %v342 = vsel %vm278, 0.0, %v178
      %v343 = vsel %vm279, 0.0, %v179
      %v344 = vsel %vm280, 0.0, %v180
      %v345 = vsel %vm281, 0.0, %v181
      %v346 = vsel %vm282, 0.0, %v182
      %v347 = vsel %vm283, 0.0, %v183
      %v348 = vsel %vm284, 0.0, %v184
      %v349 = vsel %vm285, 0.0, %v185
      %v350 = vsel %vm286, 0.0, %v186
      %v351 = vsel %vm287, 0.0, %v187
      %v352 = vsel %vm288, 0.0, %v188
      %v353 = vsel %vm289, 0.0, %v189
      %v354 = vsel %vm290, 0.0, %v190
      %v355 = vsel %vm291, 0.0, %v191
      %v356 = vsel %vm292, 0.0, %v192
      %v357 = vsel %vm293, 0.0, %v193
      %v358 = vsel %vm294, 0.0, %v194
      %v359 = vsel %vm295, 0.0, %v195
      %v360 = vsel %vm296, 0.0, %v196
      %v361 = vsel %vm297, 0.0, %v197
      %v362 = vsel %vm298, 0.0, %v198
      %v363 = vsel %vm299, 0.0, %v199
      %v364 = vsel %vm300, 0.0, %v200
      %v365 = vsel %vm301, 0.0, %v201
      %v366 = vsel %vm302, 0.0, %v202
      %v367 = vsel %vm303, 0.0, %v203
      %v368 = vsel %vm304, 0.0, %v204
      %v369 = vsel %vm305, 0.0, %v205
      %v370 = vsel %vm306, 0.0, %v206
      %v371 = vsel %vm307, 0.0, %v207
      %v372 = vsel %vm308, 0.0, %v208
      %v373 = vsel %vm309, 0.0, %v209
      %v374 = vsel %vm310, 0.0, %v210
      %v375 = vsel %vm311, 0.0, %v211
      %v376 = vsel %vm312, 0.0, %v212
      %v377 = vsel %vm313, 0.0, %v213
      %v378 = vsel %vm314, 0.0, %v214
      %v379 = vsel %vm315, 0.0, %v215
      %v380 = vsel %vm316, 0.0, %v216
      %v381 = vsel %vm317, 0.0, %v217
      %v382 = vsel %vm318, 0.0, %v218
      %v383 = vsel %vm319, 0.0, %v219
      %v384 = vsel %vm320, 0.0, %v220
      %v385 = vsel %vm321, 0.0, %v221
      %v386 = vsel %vm322, 0.0, %v222
      %v387 = vsel %vm323, 0.0, %v223
      %v388 = vsel %vm324, 0.0, %v224
      %389 = vst [vmem:[#allocation5] sm:$0xff] %v325
      %390 = vst [vmem:[#allocation5 + $0x8] sm:$0xff] %v326
      %391 = vst [vmem:[#allocation5 + $0x10] sm:$0xff] %v327
      %392 = vst [vmem:[#allocation5 + $0x18] sm:$0xff] %v328
      %393 = vst [vmem:[#allocation5 + $0x20] sm:$0xff] %v329
      %394 = vst [vmem:[#allocation5 + $0x28] sm:$0xff] %v330
      %395 = vst [vmem:[#allocation5 + $0x30] sm:$0xff] %v331
      %396 = vst [vmem:[#allocation5 + $0x38] sm:$0xff] %v332
      %397 = vst [vmem:[#allocation5 + $0x40] sm:$0xff] %v333
      %398 = vst [vmem:[#allocation5 + $0x48] sm:$0xff] %v334
      %399 = vst [vmem:[#allocation5 + $0x50] sm:$0xff] %v335
      %400 = vst [vmem:[#allocation5 + $0x58] sm:$0xff] %v336
      %401 = vst [vmem:[#allocation5 + $0x60] sm:$0xff] %v337
      %402 = vst [vmem:[#allocation5 + $0x68] sm:$0xff] %v338
      %403 = vst [vmem:[#allocation5 + $0x70] sm:$0xff] %v339
      %404 = vst [vmem:[#allocation5 + $0x78] sm:$0xff] %v340
      %405 = vst [vmem:[#allocation5 + $0x80] sm:$0xff] %v341
      %406 = vst [vmem:[#allocation5 + $0x88] sm:$0xff] %v342
      %407 = vst [vmem:[#allocation5 + $0x90] sm:$0xff] %v343
      %408 = vst [vmem:[#allocation5 + $0x98] sm:$0xff] %v344
      %409 = vst [vmem:[#allocation5 + $0xa0] sm:$0xff] %v345
      %410 = vst [vmem:[#allocation5 + $0xa8] sm:$0xff] %v346
      %411 = vst [vmem:[#allocation5 + $0xb0] sm:$0xff] %v347
      %412 = vst [vmem:[#allocation5 + $0xb8] sm:$0xff] %v348
      %413 = vst [vmem:[#allocation5 + $0xc0] sm:$0xff] %v349
      %414 = vst [vmem:[#allocation5 + $0xc8] sm:$0xff] %v350
      %415 = vst [vmem:[#allocation5 + $0xd0] sm:$0xff] %v351
      %416 = vst [vmem:[#allocation5 + $0xd8] sm:$0xff] %v352
      %417 = vst [vmem:[#allocation5 + $0xe0] sm:$0xff] %v353
      %418 = vst [vmem:[#allocation5 + $0xe8] sm:$0xff] %v354
      %419 = vst [vmem:[#allocation5 + $0xf0] sm:$0xff] %v355
      %420 = vst [vmem:[#allocation5 + $0xf8] sm:$0xff] %v356
      %421 = vst [vmem:[#allocation5 + $0x100] sm:$0xff] %v357
      %422 = vst [vmem:[#allocation5 + $0x108] sm:$0xff] %v358
      %423 = vst [vmem:[#allocation5 + $0x110] sm:$0xff] %v359
      %424 = vst [vmem:[#allocation5 + $0x118] sm:$0xff] %v360
      %425 = vst [vmem:[#allocation5 + $0x120] sm:$0xff] %v361
      %426 = vst [vmem:[#allocation5 + $0x128] sm:$0xff] %v362
      %427 = vst [vmem:[#allocation5 + $0x130] sm:$0xff] %v363
      %428 = vst [vmem:[#allocation5 + $0x138] sm:$0xff] %v364
      %429 = vst [vmem:[#allocation5 + $0x140] sm:$0xff] %v365
      %430 = vst [vmem:[#allocation5 + $0x148] sm:$0xff] %v366
      %431 = vst [vmem:[#allocation5 + $0x150] sm:$0xff] %v367
      %432 = vst [vmem:[#allocation5 + $0x158] sm:$0xff] %v368
      %433 = vst [vmem:[#allocation5 + $0x160] sm:$0xff] %v369
      %434 = vst [vmem:[#allocation5 + $0x168] sm:$0xff] %v370
      %435 = vst [vmem:[#allocation5 + $0x170] sm:$0xff] %v371
      %436 = vst [vmem:[#allocation5 + $0x178] sm:$0xff] %v372
      %437 = vst [vmem:[#allocation5 + $0x180] sm:$0xff] %v373
      %438 = vst [vmem:[#allocation5 + $0x188] sm:$0xff] %v374
      %439 = vst [vmem:[#allocation5 + $0x190] sm:$0xff] %v375
      %440 = vst [vmem:[#allocation5 + $0x198] sm:$0xff] %v376
      %441 = vst [vmem:[#allocation5 + $0x1a0] sm:$0xff] %v377
      %442 = vst [vmem:[#allocation5 + $0x1a8] sm:$0xff] %v378
      %443 = vst [vmem:[#allocation5 + $0x1b0] sm:$0xff] %v379
      %444 = vst [vmem:[#allocation5 + $0x1b8] sm:$0xff] %v380
      %445 = vst [vmem:[#allocation5 + $0x1c0] sm:$0xff] %v381
      %446 = vst [vmem:[#allocation5 + $0x1c8] sm:$0xff] %v382
      %447 = vst [vmem:[#allocation5 + $0x1d0] sm:$0xff] %v383
      %448 = vst [vmem:[#allocation5 + $0x1d8] sm:$0xff] %v384
      %449 = vst [vmem:[#allocation5 + $0x1e0] sm:$0xff] %v385
      %450 = vst [vmem:[#allocation5 + $0x1e8] sm:$0xff] %v386
      %451 = vst [vmem:[#allocation5 + $0x1f0] sm:$0xff] %v387
      %452 = vst [vmem:[#allocation5 + $0x1f8] sm:$0xff] %v388
    $region17: #{tpu_custom_call.1} parent=1 // pred_fallthru
      _
    // Predicated region
    $region18: #{tpu_custom_call.1} parent=1 // pred_check
      _
    $region19: #{tpu_custom_call.1} parent=1 // pred_check_branch
      %454 = sbr.rel (0) target = $region21
    $region20: #{tpu_custom_call.1} parent=1 // pred_region
      %456 = vsyncadd [#allocation4], 0
      %s457 = sshll.u32 [#allocation5], 4
      %s458 = int_to_ptr.vmem [resolvable:$true] %s457
      %s459 = sshll.u32 %s1, 4
      %s460 = int_to_ptr.hbm [resolvable:$true] %s459
      %465 = dma.vmem_to_hbm [thread:$0]  %s458, 8192, %s460, [#allocation4], 256, 256, 16
    $region21: #{tpu_custom_call.1} parent=1 // pred_fallthru
      _
    // Predicated region
    $region22: #{tpu_custom_call.1} parent=1 // pred_check
      _
    $region23: #{tpu_custom_call.1} parent=1 // pred_check_branch
      %467 = sbr.rel (0) target = $region25
    $region24: #{tpu_custom_call.1} parent=1 // pred_region
      %469 = dma.done [#allocation4], 8192
    $region25: #{tpu_custom_call.1} parent=1 // pred_fallthru
      _
    %470 = vsyncpa [#allocation3], 1
    %471 = vsyncpa [#allocation4], 1

</llo_original>
